<compile_context>
chip_gen: v7x
topology: tpu7x:2x2x1
jax: 0.10.0
libtpu: 0.0.40
codegen_flags: <defaults>
</compile_context>

<pallas_src>
import numpy as np
import jax
import jax.numpy as jnp
from jax.experimental import pallas as pl
from jax.experimental.pallas import tpu as pltpu

# ---- model hyper-parameters (synthetic "small model") -----------------------
B = 2          # batch
S = 8          # seq_len
H = 32         # hidden_dim
HD = 16        # head_dim
NQ = 4         # num query heads   (q_proj.out_features = NQ*HD = 64)
NKV = 2        # num kv heads      (k_proj.out_features = NKV*HD = 32)
EXPAND = NQ // NKV
QW = NQ * HD   # 64
KW = NKV * HD  # 32
VOCAB = 64
COMPRESSION_RATIO = 0.5
ROPE_BASE = 10000.0


def token_pruner_attn_kernel(x_ref, w_ref, wr_ref, cos_ref, sin_ref, imp_ref):
    """One batch row-block per grid step.

    x_ref   : (S, H)        bf16   embeddings for this batch row
    w_ref   : (H, QW+KW)    bf16   [q_proj | k_proj] weights, transposed, merged
    wr_ref  : (H, QW+KW)    bf16   same, with rotate_half folded in per head block
    cos_ref : (S, QW+KW)    bf16   cos table tiled over q heads then kv heads
    sin_ref : (S, QW+KW)    bf16   sin table tiled over q heads then kv heads
    imp_ref : (1, 1, S)     f32    per-token importance for this batch row
    """
    x = x_ref[...]                                                     # bf16 -> MXU

    # Merged projections: 2 matmuls (bf16 x bf16 -> f32 accumulate).
    qk = jnp.dot(x, w_ref[...], preferred_element_type=jnp.float32)    # (S, QW+KW)
    qkr = jnp.dot(x, wr_ref[...], preferred_element_type=jnp.float32)  # == rotate_half per head

    cos = cos_ref[...].astype(jnp.float32)
    sin = sin_ref[...].astype(jnp.float32)
    # Rotary for q and k on one slab; cast once to bf16 for the score matmuls.
    rot = (qk * cos + qkr * sin).astype(jnp.bfloat16)                  # (S, QW+KW)

    inv_hn = 1.0 / float(NQ * S)
    per_key = jnp.zeros((1, S), jnp.float32)
    # Per-head accumulation: small live set, no GQA k duplication, no stacks.
    # NOTE: matches the PyTorch module exactly: no 1/sqrt(head_dim) scaling and
    # the causal mask is built but never applied in the reference code.
    for h in range(NQ):
        g = h // EXPAND
        q_h = rot[:, h * HD:(h + 1) * HD]                              # (S, HD) bf16
        k_g = rot[:, QW + g * HD:QW + (g + 1) * HD]                    # (S, HD) bf16
        s = jnp.einsum('qd,kd->qk', q_h, k_g,
                       preferred_element_type=jnp.float32)             # (S, S) f32
        m = s.max(axis=-1, keepdims=True)
        p = jnp.exp(s - m)
        probs = p / p.sum(axis=-1, keepdims=True)   # exact divide: keeps top-k order stable
        per_key = per_key + probs.sum(axis=0, keepdims=True)           # (1, S)

    imp_ref[...] = (per_key * inv_hn).reshape(1, 1, S)


def _fold_rotate_half_into_weight(w_t, n_heads, head_dim):
    """rotate_half(x @ W_t) == x @ fold(W_t): permute+negate columns per head block."""
    hid = w_t.shape[0]
    half = head_dim // 2
    w3 = w_t.reshape(hid, n_heads, head_dim)
    w3r = jnp.concatenate([-w3[..., half:], w3[..., :half]], axis=-1)
    return w3r.reshape(hid, n_heads * head_dim)


def token_pruner_attention(emb, wq_t, wk_t, cos, sin):
    """emb: (B,S,H) bf16 -> importance scores (B,S) f32."""
    bsz, seq, hid = emb.shape
    x2d = emb.reshape(bsz * seq, hid)

    # rotate_half folded into (exactly representable) bf16 weight copies,
    # then q|k merged column-wise so the kernel needs only two matmuls.
    wq_rot_t = _fold_rotate_half_into_weight(wq_t, NQ, HD)
    wk_rot_t = _fold_rotate_half_into_weight(wk_t, NKV, HD)
    w_cat = jnp.concatenate([wq_t, wk_t], axis=1)            # (H, QW+KW) bf16
    wr_cat = jnp.concatenate([wq_rot_t, wk_rot_t], axis=1)   # (H, QW+KW) bf16

    # cos/sin tiled across heads only (q heads then kv heads), kept bf16.
    # Batch replication happens via the grid-invariant BlockSpec, not jnp.tile.
    cos_b = cos.astype(jnp.bfloat16)
    sin_b = sin.astype(jnp.bfloat16)
    cos_cat = jnp.concatenate([jnp.tile(cos_b, (1, NQ)), jnp.tile(cos_b, (1, NKV))], axis=1)
    sin_cat = jnp.concatenate([jnp.tile(sin_b, (1, NQ)), jnp.tile(sin_b, (1, NKV))], axis=1)

    out = pl.pallas_call(
        token_pruner_attn_kernel,
        out_shape=jax.ShapeDtypeStruct((bsz, 1, seq), jnp.float32),
        grid_spec=pltpu.PrefetchScalarGridSpec(
            num_scalar_prefetch=0,
            grid=(bsz,),                                   # batch-parallel (2 TCs on v7x)
            in_specs=[
                pl.BlockSpec((seq, hid), lambda b: (b, 0)),            # per-batch rows
                pl.BlockSpec(w_cat.shape, lambda b: (0, 0)),           # grid-invariant
                pl.BlockSpec(wr_cat.shape, lambda b: (0, 0)),          # grid-invariant
                pl.BlockSpec(cos_cat.shape, lambda b: (0, 0)),         # grid-invariant
                pl.BlockSpec(sin_cat.shape, lambda b: (0, 0)),         # grid-invariant
            ],
            out_specs=pl.BlockSpec((1, 1, seq), lambda b: (b, 0, 0)),
        ),
        compiler_params=pltpu.CompilerParams(
            dimension_semantics=("parallel",)),
    )(x2d, w_cat, wr_cat, cos_cat, sin_cat)
    return out.reshape(bsz, seq)


def token_pruner_attention_ref(emb, wq_t, wk_t, cos, sin):
    """Pure-JAX reference mirroring the PyTorch module (for a sanity check)."""
    x = emb.astype(jnp.float32)
    q = jnp.einsum('bsh,hd->bsd', x, wq_t.astype(jnp.float32))
    k = jnp.einsum('bsh,hd->bsd', x, wk_t.astype(jnp.float32))
    q = q.reshape(B, S, NQ, HD).transpose(0, 2, 1, 3)
    k = k.reshape(B, S, NKV, HD).transpose(0, 2, 1, 3)
    c = cos.astype(jnp.float32)[None, None]
    s = sin.astype(jnp.float32)[None, None]

    def rot(t):
        half = t.shape[-1] // 2
        return jnp.concatenate([-t[..., half:], t[..., :half]], axis=-1)

    q = q * c + rot(q) * s
    k = k * c + rot(k) * s
    k = jnp.repeat(k, EXPAND, axis=1)
    sc = jnp.einsum('bhqd,bhkd->bhqk', q, k)
    w = jax.nn.softmax(sc, axis=-1)
    return w.mean(axis=1).mean(axis=1)              # (B, S)


def make_rotary_tables(seq_len, head_dim, dtype=jnp.bfloat16):
    # Llama rotary embedding: cos/sin of shape (S, head_dim)
    pos = jnp.arange(seq_len, dtype=jnp.float32)
    inv_freq = 1.0 / (ROPE_BASE ** (jnp.arange(0, head_dim, 2, dtype=jnp.float32) / head_dim))
    freqs = pos[:, None] * inv_freq[None, :]            # (S, HD/2)
    angles = jnp.concatenate([freqs, freqs], axis=-1)   # (S, HD)
    return jnp.cos(angles).astype(dtype), jnp.sin(angles).astype(dtype)


if __name__ == "__main__":
    key = jax.random.PRNGKey(0)
    k_emb, k_wq, k_wk, k_ids = jax.random.split(key, 4)

    # Deterministic synthetic parameters (module __init__ shapes), bf16 like the HF model.
    emb_table = (jax.random.normal(k_emb, (VOCAB, H), jnp.float32) * 0.02).astype(jnp.bfloat16)
    w_q = (jax.random.normal(k_wq, (NQ * HD, H), jnp.float32) * 0.02).astype(jnp.bfloat16)   # (out, in)
    w_k = (jax.random.normal(k_wk, (NKV * HD, H), jnp.float32) * 0.02).astype(jnp.bfloat16)  # (out, in)

    input_ids = jax.random.randint(k_ids, (B, S), 0, VOCAB, dtype=jnp.int32)

    # ---- forward (glue in JAX, hot path in Pallas) ----
    embeddings = jnp.take(emb_table, input_ids, axis=0)          # (B, S, H) bf16
    cos, sin = make_rotary_tables(S, HD)

    imp = token_pruner_attention(embeddings, w_q.T, w_k.T, cos, sin)   # (B, S) f32
    imp = jax.block_until_ready(imp)

    # sanity check against plain-JAX f32 reference (kernel uses bf16 MXU operands)
    imp_ref = token_pruner_attention_ref(embeddings, w_q.T, w_k.T, cos, sin)
    np.testing.assert_allclose(np.asarray(imp), np.asarray(imp_ref), rtol=2e-2, atol=1e-2)

    importance_scores = imp[0]                                   # == attn.mean(1).mean(1)[0]

    compressed_length = max(int(S * COMPRESSION_RATIO), 2)
    _, topk_ids = jax.lax.top_k(importance_scores, compressed_length)
    topk_ids = np.asarray(jnp.sort(topk_ids))
    # TODO(synk): dynamic-length append has no static-shape Pallas/JAX equivalent; done on host.
    if topk_ids[-1] != S - 1:
        topk_ids = np.concatenate([topk_ids, np.array([S - 1], dtype=topk_ids.dtype)])
    pruned_tokens = np.asarray(input_ids[0])[topk_ids]

    assert pruned_tokens.shape == topk_ids.shape
    print("KERNEL_OK")
</pallas_src>

<mosaic_0001>
module attributes {stable_mosaic.version = 11 : i64} {
  func.func @token_pruner_attn_kernel(%arg0: i32, %arg1: memref<8x32xbf16, #tpu.memory_space<vmem>>, %arg2: memref<32x96xbf16, #tpu.memory_space<vmem>>, %arg3: memref<32x96xbf16, #tpu.memory_space<vmem>>, %arg4: memref<8x96xbf16, #tpu.memory_space<vmem>>, %arg5: memref<8x96xbf16, #tpu.memory_space<vmem>>, %arg6: memref<1x1x8xf32, #tpu.memory_space<vmem>>) attributes {dimension_semantics = [#tpu.dimension_semantics<parallel>], iteration_bounds = array<i64: 2>, scalar_prefetch = 0 : i64, scratch_operands = 0 : i64, tpu.core_type = #tpu.core_type<tc>, window_params = [{transform_indices = @transform_0, window_bounds = array<i64: 8, 32>}, {pipeline_mode = #tpu.pipeline_mode<synchronous>, transform_indices = @transform_1, window_bounds = array<i64: 32, 96>}, {pipeline_mode = #tpu.pipeline_mode<synchronous>, transform_indices = @transform_2, window_bounds = array<i64: 32, 96>}, {pipeline_mode = #tpu.pipeline_mode<synchronous>, transform_indices = @transform_3, window_bounds = array<i64: 8, 96>}, {pipeline_mode = #tpu.pipeline_mode<synchronous>, transform_indices = @transform_4, window_bounds = array<i64: 8, 96>}, {transform_indices = @transform_5, window_bounds = array<i64: 1, 1, 8>}]} {
    %c0 = arith.constant 0 : index
    %c0_0 = arith.constant 0 : index
    %0 = vector.load %arg1[%c0, %c0_0] : memref<8x32xbf16, #tpu.memory_space<vmem>>, vector<8x32xbf16>
    %c0_1 = arith.constant 0 : index
    %c0_2 = arith.constant 0 : index
    %1 = vector.load %arg2[%c0_1, %c0_2] : memref<32x96xbf16, #tpu.memory_space<vmem>>, vector<32x96xbf16>
    %cst = arith.constant dense<0.000000e+00> : vector<8x96xf32>
    %2 = tpu.matmul %0, %1, %cst {dimension_numbers = #tpu.dot_dimension_numbers<[1], [0], [0], [1], [0, 0, 1, 1], [], []>} : vector<8x32xbf16>, vector<32x96xbf16>, vector<8x96xf32> -> vector<8x96xf32>
    %c0_3 = arith.constant 0 : index
    %c0_4 = arith.constant 0 : index
    %3 = vector.load %arg3[%c0_3, %c0_4] : memref<32x96xbf16, #tpu.memory_space<vmem>>, vector<32x96xbf16>
    %cst_5 = arith.constant dense<0.000000e+00> : vector<8x96xf32>
    %4 = tpu.matmul %0, %3, %cst_5 {dimension_numbers = #tpu.dot_dimension_numbers<[1], [0], [0], [1], [0, 0, 1, 1], [], []>} : vector<8x32xbf16>, vector<32x96xbf16>, vector<8x96xf32> -> vector<8x96xf32>
    %c0_6 = arith.constant 0 : index
    %c0_7 = arith.constant 0 : index
    %5 = vector.load %arg4[%c0_6, %c0_7] : memref<8x96xbf16, #tpu.memory_space<vmem>>, vector<8x96xbf16>
    %6 = arith.extf %5 : vector<8x96xbf16> to vector<8x96xf32>
    %c0_8 = arith.constant 0 : index
    %c0_9 = arith.constant 0 : index
    %7 = vector.load %arg5[%c0_8, %c0_9] : memref<8x96xbf16, #tpu.memory_space<vmem>>, vector<8x96xbf16>
    %8 = arith.extf %7 : vector<8x96xbf16> to vector<8x96xf32>
    %9 = arith.mulf %2, %6 : vector<8x96xf32>
    %10 = arith.mulf %4, %8 : vector<8x96xf32>
    %11 = arith.addf %9, %10 : vector<8x96xf32>
    %12 = arith.truncf %11 : vector<8x96xf32> to vector<8x96xbf16>
    %cst_10 = arith.constant 0.000000e+00 : f32
    %13 = vector.broadcast %cst_10 : f32 to vector<1x8xf32>
    %14 = vector.extract_strided_slice %12 {offsets = [0, 0], sizes = [8, 16], strides = [1, 1]} : vector<8x96xbf16> to vector<8x16xbf16>
    %15 = vector.extract_strided_slice %12 {offsets = [0, 64], sizes = [8, 16], strides = [1, 1]} : vector<8x96xbf16> to vector<8x16xbf16>
    "tpu.trace_start"() <{level = 10 : i32, message = "qd,kd->qk"}> : () -> ()
    %cst_11 = arith.constant dense<0.000000e+00> : vector<8x8xf32>
    %16 = tpu.matmul %14, %15, %cst_11 {dimension_numbers = #tpu.dot_dimension_numbers<[1], [1], [0], [0], [0, 0, 1, 0], [], []>} : vector<8x16xbf16>, vector<8x16xbf16>, vector<8x8xf32> -> vector<8x8xf32>
    "tpu.trace_stop"() : () -> ()
    %cst_12 = arith.constant dense<0xFF800000> : vector<8xf32>
    %17 = vector.multi_reduction <maximumf>, %16, %cst_12 [1] : vector<8x8xf32> to vector<8xf32>
    %18 = vector.shape_cast %17 : vector<8xf32> to vector<8x1xf32>
    %19 = vector.broadcast %18 : vector<8x1xf32> to vector<8x8xf32>
    %20 = arith.subf %16, %19 : vector<8x8xf32>
    %21 = math.exp %20 : vector<8x8xf32>
    %cst_13 = arith.constant dense<0.000000e+00> : vector<8xf32>
    %22 = vector.multi_reduction <add>, %21, %cst_13 [1] : vector<8x8xf32> to vector<8xf32>
    %23 = vector.shape_cast %22 : vector<8xf32> to vector<8x1xf32>
    %24 = vector.broadcast %23 : vector<8x1xf32> to vector<8x8xf32>
    %25 = arith.divf %21, %24 : vector<8x8xf32>
    %cst_14 = arith.constant dense<0.000000e+00> : vector<8xf32>
    %26 = vector.multi_reduction <add>, %25, %cst_14 [0] : vector<8x8xf32> to vector<8xf32>
    %27 = vector.shape_cast %26 : vector<8xf32> to vector<1x8xf32>
    %28 = arith.addf %13, %27 : vector<1x8xf32>
    %29 = vector.extract_strided_slice %12 {offsets = [0, 16], sizes = [8, 16], strides = [1, 1]} : vector<8x96xbf16> to vector<8x16xbf16>
    %30 = vector.extract_strided_slice %12 {offsets = [0, 64], sizes = [8, 16], strides = [1, 1]} : vector<8x96xbf16> to vector<8x16xbf16>
    "tpu.trace_start"() <{level = 10 : i32, message = "qd,kd->qk"}> : () -> ()
    %cst_15 = arith.constant dense<0.000000e+00> : vector<8x8xf32>
    %31 = tpu.matmul %29, %30, %cst_15 {dimension_numbers = #tpu.dot_dimension_numbers<[1], [1], [0], [0], [0, 0, 1, 0], [], []>} : vector<8x16xbf16>, vector<8x16xbf16>, vector<8x8xf32> -> vector<8x8xf32>
    "tpu.trace_stop"() : () -> ()
    %cst_16 = arith.constant dense<0xFF800000> : vector<8xf32>
    %32 = vector.multi_reduction <maximumf>, %31, %cst_16 [1] : vector<8x8xf32> to vector<8xf32>
    %33 = vector.shape_cast %32 : vector<8xf32> to vector<8x1xf32>
    %34 = vector.broadcast %33 : vector<8x1xf32> to vector<8x8xf32>
    %35 = arith.subf %31, %34 : vector<8x8xf32>
    %36 = math.exp %35 : vector<8x8xf32>
    %cst_17 = arith.constant dense<0.000000e+00> : vector<8xf32>
    %37 = vector.multi_reduction <add>, %36, %cst_17 [1] : vector<8x8xf32> to vector<8xf32>
    %38 = vector.shape_cast %37 : vector<8xf32> to vector<8x1xf32>
    %39 = vector.broadcast %38 : vector<8x1xf32> to vector<8x8xf32>
    %40 = arith.divf %36, %39 : vector<8x8xf32>
    %cst_18 = arith.constant dense<0.000000e+00> : vector<8xf32>
    %41 = vector.multi_reduction <add>, %40, %cst_18 [0] : vector<8x8xf32> to vector<8xf32>
    %42 = vector.shape_cast %41 : vector<8xf32> to vector<1x8xf32>
    %43 = arith.addf %28, %42 : vector<1x8xf32>
    %44 = vector.extract_strided_slice %12 {offsets = [0, 32], sizes = [8, 16], strides = [1, 1]} : vector<8x96xbf16> to vector<8x16xbf16>
    %45 = vector.extract_strided_slice %12 {offsets = [0, 80], sizes = [8, 16], strides = [1, 1]} : vector<8x96xbf16> to vector<8x16xbf16>
    "tpu.trace_start"() <{level = 10 : i32, message = "qd,kd->qk"}> : () -> ()
    %cst_19 = arith.constant dense<0.000000e+00> : vector<8x8xf32>
    %46 = tpu.matmul %44, %45, %cst_19 {dimension_numbers = #tpu.dot_dimension_numbers<[1], [1], [0], [0], [0, 0, 1, 0], [], []>} : vector<8x16xbf16>, vector<8x16xbf16>, vector<8x8xf32> -> vector<8x8xf32>
    "tpu.trace_stop"() : () -> ()
    %cst_20 = arith.constant dense<0xFF800000> : vector<8xf32>
    %47 = vector.multi_reduction <maximumf>, %46, %cst_20 [1] : vector<8x8xf32> to vector<8xf32>
    %48 = vector.shape_cast %47 : vector<8xf32> to vector<8x1xf32>
    %49 = vector.broadcast %48 : vector<8x1xf32> to vector<8x8xf32>
    %50 = arith.subf %46, %49 : vector<8x8xf32>
    %51 = math.exp %50 : vector<8x8xf32>
    %cst_21 = arith.constant dense<0.000000e+00> : vector<8xf32>
    %52 = vector.multi_reduction <add>, %51, %cst_21 [1] : vector<8x8xf32> to vector<8xf32>
    %53 = vector.shape_cast %52 : vector<8xf32> to vector<8x1xf32>
    %54 = vector.broadcast %53 : vector<8x1xf32> to vector<8x8xf32>
    %55 = arith.divf %51, %54 : vector<8x8xf32>
    %cst_22 = arith.constant dense<0.000000e+00> : vector<8xf32>
    %56 = vector.multi_reduction <add>, %55, %cst_22 [0] : vector<8x8xf32> to vector<8xf32>
    %57 = vector.shape_cast %56 : vector<8xf32> to vector<1x8xf32>
    %58 = arith.addf %43, %57 : vector<1x8xf32>
    %59 = vector.extract_strided_slice %12 {offsets = [0, 48], sizes = [8, 16], strides = [1, 1]} : vector<8x96xbf16> to vector<8x16xbf16>
    %60 = vector.extract_strided_slice %12 {offsets = [0, 80], sizes = [8, 16], strides = [1, 1]} : vector<8x96xbf16> to vector<8x16xbf16>
    "tpu.trace_start"() <{level = 10 : i32, message = "qd,kd->qk"}> : () -> ()
    %cst_23 = arith.constant dense<0.000000e+00> : vector<8x8xf32>
    %61 = tpu.matmul %59, %60, %cst_23 {dimension_numbers = #tpu.dot_dimension_numbers<[1], [1], [0], [0], [0, 0, 1, 0], [], []>} : vector<8x16xbf16>, vector<8x16xbf16>, vector<8x8xf32> -> vector<8x8xf32>
    "tpu.trace_stop"() : () -> ()
    %cst_24 = arith.constant dense<0xFF800000> : vector<8xf32>
    %62 = vector.multi_reduction <maximumf>, %61, %cst_24 [1] : vector<8x8xf32> to vector<8xf32>
    %63 = vector.shape_cast %62 : vector<8xf32> to vector<8x1xf32>
    %64 = vector.broadcast %63 : vector<8x1xf32> to vector<8x8xf32>
    %65 = arith.subf %61, %64 : vector<8x8xf32>
    %66 = math.exp %65 : vector<8x8xf32>
    %cst_25 = arith.constant dense<0.000000e+00> : vector<8xf32>
    %67 = vector.multi_reduction <add>, %66, %cst_25 [1] : vector<8x8xf32> to vector<8xf32>
    %68 = vector.shape_cast %67 : vector<8xf32> to vector<8x1xf32>
    %69 = vector.broadcast %68 : vector<8x1xf32> to vector<8x8xf32>
    %70 = arith.divf %66, %69 : vector<8x8xf32>
    %cst_26 = arith.constant dense<0.000000e+00> : vector<8xf32>
    %71 = vector.multi_reduction <add>, %70, %cst_26 [0] : vector<8x8xf32> to vector<8xf32>
    %72 = vector.shape_cast %71 : vector<8xf32> to vector<1x8xf32>
    %73 = arith.addf %58, %72 : vector<1x8xf32>
    %cst_27 = arith.constant 3.125000e-02 : f32
    %74 = vector.broadcast %cst_27 : f32 to vector<1x8xf32>
    %75 = arith.mulf %73, %74 : vector<1x8xf32>
    %76 = vector.shape_cast %75 : vector<1x8xf32> to vector<1x1x8xf32>
    %c0_28 = arith.constant 0 : index
    %c0_29 = arith.constant 0 : index
    %c0_30 = arith.constant 0 : index
    %77 = vector.load %arg6[%c0_28, %c0_29, %c0_30] : memref<1x1x8xf32, #tpu.memory_space<vmem>>, vector<1x1x8xf32>
    tpu.vector_store %arg6[%c0_28, %c0_29, %c0_30], %76 {strides = array<i32>} : memref<1x1x8xf32, #tpu.memory_space<vmem>>, vector<1x1x8xf32>,
    return
  }
  func.func @transform_0(%arg0: i32) -> (i32, i32) {
    %c0_i32 = arith.constant 0 : i32
    %c0_i32_0 = arith.constant 0 : i32
    return %arg0, %c0_i32 : i32, i32
  }
  func.func @transform_1(%arg0: i32) -> (i32, i32) {
    %c0_i32 = arith.constant 0 : i32
    %c0_i32_0 = arith.constant 0 : i32
    %c0_i32_1 = arith.constant 0 : i32
    return %c0_i32, %c0_i32_0 : i32, i32
  }
  func.func @transform_2(%arg0: i32) -> (i32, i32) {
    %c0_i32 = arith.constant 0 : i32
    %c0_i32_0 = arith.constant 0 : i32
    %c0_i32_1 = arith.constant 0 : i32
    return %c0_i32, %c0_i32_0 : i32, i32
  }
  func.func @transform_3(%arg0: i32) -> (i32, i32) {
    %c0_i32 = arith.constant 0 : i32
    %c0_i32_0 = arith.constant 0 : i32
    %c0_i32_1 = arith.constant 0 : i32
    return %c0_i32, %c0_i32_0 : i32, i32
  }
  func.func @transform_4(%arg0: i32) -> (i32, i32) {
    %c0_i32 = arith.constant 0 : i32
    %c0_i32_0 = arith.constant 0 : i32
    %c0_i32_1 = arith.constant 0 : i32
    return %c0_i32, %c0_i32_0 : i32, i32
  }
  func.func @transform_5(%arg0: i32) -> (i32, i32, i32) {
    %c0_i32 = arith.constant 0 : i32
    %c0_i32_0 = arith.constant 0 : i32
    %c0_i32_1 = arith.constant 0 : i32
    return %arg0, %c0_i32, %c0_i32_0 : i32, i32, i32
  }
}

</mosaic_0001>

<llo_original>
// kernel: tpu_custom_call.1
$region0: #{tpu_custom_call.1}
  #allocation0 [shape = 'u32[]', space=smem, size = 0x4, offset = 0x4, fixed_abs, tag = 'smem constant byte address 0x4 - core index']
  #allocation1 [shape = 'u32[144,128]{1,0:T(1,128)}', space=vmem, size = 0x12000, scoped, tag = 'internal scratch']
  %s0 = inlined_call_operand.hbm [shape: bf16[16,32], index: 0, kind: input, shape index: {}]
  %s1 = inlined_call_operand.hbm [shape: bf16[32,96], index: 1, kind: input, shape index: {}]
  %s2 = inlined_call_operand.hbm [shape: bf16[32,96], index: 2, kind: input, shape index: {}]
  %s3 = inlined_call_operand.vmem [shape: bf16[8,96], index: 3, kind: input, shape index: {}]
  %s4 = inlined_call_operand.vmem [shape: bf16[8,96], index: 4, kind: input, shape index: {}]
  %s5 = inlined_call_operand.hbm [shape: f32[2,1,8], index: 5, kind: output, shape index: {}]
  %s6 = sld [smem:[#allocation0]]
  $region65: #{tpu_custom_call.1} parent=0
    _
  %s8 = ssub.s32 1, %s6
  %s9 = scalar_select 0, %s8, %s6
  $region1: #{tpu_custom_call.1} parent=0
    #allocation2 [shape = 'u8[4096]{0}', space=vmem, size = 0x1000, scoped, tag = 'input window, operand 0']
    #allocation3 [shape = 's32[2]{0}', space=sflag, size = 0x8, scoped, tag = 'scoped memory for tpu_custom_call.1']
    #allocation4 [shape = 's32[2]{0}', space=sflag, size = 0x8, scoped, tag = 'scoped memory for tpu_custom_call.1']
    #allocation5 [shape = 'u8[8192]{0}', space=vmem, size = 0x2000, scoped, tag = 'input window, operand 1, single buffered']
    #allocation6 [shape = 's32[1]{0}', space=sflag, size = 0x4, scoped, tag = 'scoped memory for tpu_custom_call.1']
    #allocation7 [shape = 'u8[8192]{0}', space=vmem, size = 0x2000, scoped, tag = 'input window, operand 2, single buffered']
    #allocation8 [shape = 'u8[1024]{0}', space=vmem, size = 0x400, scoped, tag = 'output window, operand 0']
    %10 = vsyncpa [#allocation3], 0
    %s11 = scalar_lea.sflag [#allocation3], 1
    %12 = vsyncpa %s11, 0
    %13 = vsyncpa [#allocation6], 0
    %14 = vsyncpa [#allocation4], 0
    %s15 = scalar_lea.sflag [#allocation4], 1
    %16 = vsyncpa %s15, 0
    loop: start=0, step=1, limit=4
    $region2: #{tpu_custom_call.1} parent=1 // loop_pre_header
      _
    $region3: #{tpu_custom_call.1} parent=1 // loop_header
      %s18 = sphi 0, %s22
      %p19 = scmp.ge.s32.totalorder %s18, 4
      %s28 = sphi 0, %s30
      %s31 = sphi 0, %s28
      %s32 = sphi 0, %s31
      %s48 = sphi 0, %s32
      %s52 = sphi 0, %s52
      %s54 = sphi 0, %s52
      %s55 = sphi 0, %s54
      %s69 = sphi 0, %s55
      %s73 = sphi 0, %s73
      %s75 = sphi 0, %s73
      %s76 = sphi 0, %s75
      %s90 = sphi 0, %s76
      %s94 = sphi 0, %s94
      %s96 = sphi 0, %s94
      %s97 = sphi 0, %s96
      %s111 = sphi 0, %s97
      %s115 = sphi 0, %s115
      %s117 = sphi 0, %s115
      %s118 = sphi 0, %s117
      %s132 = sphi 0, %s118
      %s138 = sphi 0, %s140
      %s141 = sphi 0, %s138
      %s142 = sphi 0, %s141
      %s158 = sphi 0, %s142
    $region4: #{tpu_custom_call.1} parent=1 // loop_header_branch
      %21 = sbr.rel (%p19) target = $region8
    $region5: #{tpu_custom_call.1} parent=1 // loop_body
      %s23 = ssub.s32 %s18, 1
      %s24 = ssub.s32 %s18, 2
      %s25 = sadd.s32 %s18, 1
      %s26 = ssub.s32 %s18, %s25
      %p27 = scmp.eq.s32.totalorder %s26, 0
      %s29 = sadd.s32 %s28, 1
      %s30 = scalar_select %p27, %s28, %s29
      %p33 = pneg %p27
      %p34 = scmp.eq.s32.totalorder %s18, 1
      %p35 = por %p33, %p34
      %p36 = scmp.ne.s32.totalorder %s28, %s31
      %p37 = scmp.eq.s32.totalorder %s18, 0
      %p38 = por %p36, %p37
      %p39 = scmp.ne.s32.totalorder %s28, %s31
      %p40 = scmp.eq.s32.totalorder %s23, 1
      %p41 = por %p39, %p40
      %p42 = scmp.ne.s32.totalorder %s31, %s32
      %p43 = scmp.eq.s32.totalorder %s23, 0
      %p44 = por %p42, %p43
      %p45 = scmp.ne.s32.totalorder %s31, %s32
      %p46 = scmp.eq.s32.totalorder %s24, 1
      %p47 = por %p45, %p46
      %p49 = scmp.ne.s32.totalorder %s32, %s48
      %p50 = scmp.eq.s32.totalorder %s24, 0
      %p51 = por %p49, %p50
      %s53 = sadd.s32 %s52, 1
      %p56 = scmp.eq.s32.totalorder %s18, 1
      %p57 = scmp.ne.s32.totalorder %s52, %s54
      %p58 = scmp.eq.s32.totalorder %s18, 0
      %p59 = por %p57, %p58
      %p60 = scmp.ne.s32.totalorder %s52, %s54
      %p61 = scmp.eq.s32.totalorder %s23, 1
      %p62 = por %p60, %p61
      %p63 = scmp.ne.s32.totalorder %s54, %s55
      %p64 = scmp.eq.s32.totalorder %s23, 0
      %p65 = por %p63, %p64
      %p66 = scmp.ne.s32.totalorder %s54, %s55
      %p67 = scmp.eq.s32.totalorder %s24, 1
      %p68 = por %p66, %p67
      %p70 = scmp.ne.s32.totalorder %s55, %s69
      %p71 = scmp.eq.s32.totalorder %s24, 0
      %p72 = por %p70, %p71
      %s74 = sadd.s32 %s73, 1
      %p77 = scmp.eq.s32.totalorder %s18, 1
      %p78 = scmp.ne.s32.totalorder %s73, %s75
      %p79 = scmp.eq.s32.totalorder %s18, 0
      %p80 = por %p78, %p79
      %p81 = scmp.ne.s32.totalorder %s73, %s75
      %p82 = scmp.eq.s32.totalorder %s23, 1
      %p83 = por %p81, %p82
      %p84 = scmp.ne.s32.totalorder %s75, %s76
      %p85 = scmp.eq.s32.totalorder %s23, 0
      %p86 = por %p84, %p85
      %p87 = scmp.ne.s32.totalorder %s75, %s76
      %p88 = scmp.eq.s32.totalorder %s24, 1
      %p89 = por %p87, %p88
      %p91 = scmp.ne.s32.totalorder %s76, %s90
      %p92 = scmp.eq.s32.totalorder %s24, 0
      %p93 = por %p91, %p92
      %s95 = sadd.s32 %s94, 1
      %p98 = scmp.eq.s32.totalorder %s18, 1
      %p99 = scmp.ne.s32.totalorder %s94, %s96
      %p100 = scmp.eq.s32.totalorder %s18, 0
      %p101 = por %p99, %p100
      %p102 = scmp.ne.s32.totalorder %s94, %s96
      %p103 = scmp.eq.s32.totalorder %s23, 1
      %p104 = por %p102, %p103
      %p105 = scmp.ne.s32.totalorder %s96, %s97
      %p106 = scmp.eq.s32.totalorder %s23, 0
      %p107 = por %p105, %p106
      %p108 = scmp.ne.s32.totalorder %s96, %s97
      %p109 = scmp.eq.s32.totalorder %s24, 1
      %p110 = por %p108, %p109
      %p112 = scmp.ne.s32.totalorder %s97, %s111
      %p113 = scmp.eq.s32.totalorder %s24, 0
      %p114 = por %p112, %p113
      %s116 = sadd.s32 %s115, 1
      %p119 = scmp.eq.s32.totalorder %s18, 1
      %p120 = scmp.ne.s32.totalorder %s115, %s117
      %p121 = scmp.eq.s32.totalorder %s18, 0
      %p122 = por %p120, %p121
      %p123 = scmp.ne.s32.totalorder %s115, %s117
      %p124 = scmp.eq.s32.totalorder %s23, 1
      %p125 = por %p123, %p124
      %p126 = scmp.ne.s32.totalorder %s117, %s118
      %p127 = scmp.eq.s32.totalorder %s23, 0
      %p128 = por %p126, %p127
      %p129 = scmp.ne.s32.totalorder %s117, %s118
      %p130 = scmp.eq.s32.totalorder %s24, 1
      %p131 = por %p129, %p130
      %p133 = scmp.ne.s32.totalorder %s118, %s132
      %p134 = scmp.eq.s32.totalorder %s24, 0
      %p135 = por %p133, %p134
      %s136 = ssub.s32 %s18, %s25
      %p137 = scmp.eq.s32.totalorder %s136, 0
      %s139 = sadd.s32 %s138, 1
      %s140 = scalar_select %p137, %s138, %s139
      %p143 = pneg %p137
      %p144 = scmp.eq.s32.totalorder %s18, 1
      %p145 = por %p143, %p144
      %p146 = scmp.ne.s32.totalorder %s138, %s141
      %p147 = scmp.eq.s32.totalorder %s18, 0
      %p148 = por %p146, %p147
      %p149 = scmp.ne.s32.totalorder %s138, %s141
      %p150 = scmp.eq.s32.totalorder %s23, 1
      %p151 = por %p149, %p150
      %p152 = scmp.ne.s32.totalorder %s141, %s142
      %p153 = scmp.eq.s32.totalorder %s23, 0
      %p154 = por %p152, %p153
      %p155 = scmp.ne.s32.totalorder %s141, %s142
      %p156 = scmp.eq.s32.totalorder %s24, 1
      %p157 = por %p155, %p156
      %p159 = scmp.ne.s32.totalorder %s142, %s158
      %p160 = scmp.eq.s32.totalorder %s24, 0
      %p161 = por %p159, %p160
      %p162 = scmp.le.s32.totalorder 1, %s18
      %p163 = scmp.lt.s32.totalorder %s18, 3
      %p164 = pnand %p162, %p163
      %p165 = pneg %p164
      // Predicated region
      $region9: #{tpu_custom_call.1} parent=5 // pred_check
        _
      $region10: #{tpu_custom_call.1} parent=5 // pred_check_branch
        %167 = sbr.rel (%p164) target = $region12
      $region11: #{tpu_custom_call.1} parent=5 // pred_region
        %s168 = ssub.s32 %s18, 1
        // Predicated region
        $region13: #{tpu_custom_call.1} parent=11 // pred_check
          %p169 = pneg %p65
        $region14: #{tpu_custom_call.1} parent=11 // pred_check_branch
          %171 = sbr.rel (%p169) target = $region16
        $region15: #{tpu_custom_call.1} parent=11 // pred_region
          %s173 = ssub.s32 256, 256
          %174 = vsyncadd [#allocation6], %s173
          %s175 = sshll.u32 [#allocation5], 4
          %s176 = int_to_ptr.vmem [resolvable:$true] %s175
          %181 = dma.hbm_to_vmem [thread:$0]  %s1, 256, %s176, [#allocation6], 64, 64, 4
        $region16: #{tpu_custom_call.1} parent=11 // pred_fallthru
          _
        // Predicated region
        $region17: #{tpu_custom_call.1} parent=11 // pred_check
          %p182 = pneg %p86
        $region18: #{tpu_custom_call.1} parent=11 // pred_check_branch
          %184 = sbr.rel (%p182) target = $region20
        $region19: #{tpu_custom_call.1} parent=11 // pred_region
          %s186 = ssub.s32 256, 256
          %187 = vsyncadd [#allocation6], %s186
          %s188 = sshll.u32 [#allocation7], 4
          %s189 = int_to_ptr.vmem [resolvable:$true] %s188
          %194 = dma.hbm_to_vmem [thread:$0]  %s2, 256, %s189, [#allocation6], 64, 64, 4
        $region20: #{tpu_custom_call.1} parent=11 // pred_fallthru
          _
        // Predicated region
        $region21: #{tpu_custom_call.1} parent=11 // pred_check
          %p195 = pneg %p107
        $region22: #{tpu_custom_call.1} parent=11 // pred_check_branch
          %197 = sbr.rel (%p195) target = $region24
        $region23: #{tpu_custom_call.1} parent=11 // pred_region
          _
        $region24: #{tpu_custom_call.1} parent=11 // pred_fallthru
          _
        // Predicated region
        $region25: #{tpu_custom_call.1} parent=11 // pred_check
          %p198 = pneg %p128
        $region26: #{tpu_custom_call.1} parent=11 // pred_check_branch
          %200 = sbr.rel (%p198) target = $region28
        $region27: #{tpu_custom_call.1} parent=11 // pred_region
          _
        $region28: #{tpu_custom_call.1} parent=11 // pred_fallthru
          _
      $region12: #{tpu_custom_call.1} parent=5 // pred_fallthru
        _
      %p201 = scmp.lt.s32.totalorder %s18, 2
      // Predicated region
      $region29: #{tpu_custom_call.1} parent=5 // pred_check
        %p202 = pneg %p201
      $region30: #{tpu_custom_call.1} parent=5 // pred_check_branch
        %204 = sbr.rel (%p202) target = $region32
      $region31: #{tpu_custom_call.1} parent=5 // pred_region
        // Predicated region
        $region33: #{tpu_custom_call.1} parent=31 // pred_check
          %p205 = pneg %p38
        $region34: #{tpu_custom_call.1} parent=31 // pred_check_branch
          %207 = sbr.rel (%p205) target = $region36
        $region35: #{tpu_custom_call.1} parent=31 // pred_region
          %s208 = sand.u32 %s28, 1
          %s209 = scalar_lea.sflag [#allocation3], %s208
          %s210 = sand.u32 %s28, 1
          %s211 = smul.addr %s210, 4
          %s212 = scalar_lea.vmem [#allocation2], %s211
          %s214 = ssub.s32 64, 64
          %215 = vsyncadd %s209, %s214
          %s216 = smul.addr %s18, 64
          %s217 = scalar_lea.hbm %s0, %s216
          %s219 = sshll.u32 %s212, 4
          %s220 = int_to_ptr.vmem [resolvable:$true] %s219
          %222 = dma.hbm_to_vmem [thread:$0]  %s217, 64, %s220, %s209
        $region36: #{tpu_custom_call.1} parent=31 // pred_fallthru
          _
      $region32: #{tpu_custom_call.1} parent=5 // pred_fallthru
        _
      %p223 = scmp.le.s32.totalorder 1, %s18
      %p224 = scmp.lt.s32.totalorder %s18, 3
      %p225 = pnand %p223, %p224
      %p226 = pneg %p225
      // Predicated region
      $region37: #{tpu_custom_call.1} parent=5 // pred_check
        _
      $region38: #{tpu_custom_call.1} parent=5 // pred_check_branch
        %228 = sbr.rel (%p225) target = $region40
      $region39: #{tpu_custom_call.1} parent=5 // pred_region
        %s229 = ssub.s32 %s18, 1
        %s230 = sand.u32 %s31, 1
        %s231 = scalar_lea.sflag [#allocation3], %s230
        %s232 = sand.u32 %s31, 1
        %s233 = smul.addr %s232, 4
        %s234 = scalar_lea.vmem [#allocation2], %s233
        // Predicated region
        $region41: #{tpu_custom_call.1} parent=39 // pred_check
          %p235 = pneg %p44
        $region42: #{tpu_custom_call.1} parent=39 // pred_check_branch
          %237 = sbr.rel (%p235) target = $region44
        $region43: #{tpu_custom_call.1} parent=39 // pred_region
          %238 = dma.done %s231, 64
        $region44: #{tpu_custom_call.1} parent=39 // pred_fallthru
          _
        // Predicated region
        $region45: #{tpu_custom_call.1} parent=39 // pred_check
          %p239 = pneg %p65
        $region46: #{tpu_custom_call.1} parent=39 // pred_check_branch
          %241 = sbr.rel (%p239) target = $region48
        $region47: #{tpu_custom_call.1} parent=39 // pred_region
          %242 = dma.done [#allocation6], 256
        $region48: #{tpu_custom_call.1} parent=39 // pred_fallthru
          _
        // Predicated region
        $region49: #{tpu_custom_call.1} parent=39 // pred_check
          %p243 = pneg %p86
        $region50: #{tpu_custom_call.1} parent=39 // pred_check_branch
          %245 = sbr.rel (%p243) target = $region52
        $region51: #{tpu_custom_call.1} parent=39 // pred_region
          %246 = dma.done [#allocation6], 256
        $region52: #{tpu_custom_call.1} parent=39 // pred_fallthru
          _
        %s247 = sand.u32 %s31, 1
        %s248 = scalar_lea.sflag [#allocation3], %s247
        %s249 = sand.u32 %s31, 1
        %s250 = smul.addr %s249, 4
        %s251 = scalar_lea.vmem [#allocation2], %s250
        %p252 = pneg %p44
        %p253 = pneg %p41
        %p254 = pneg %p65
        %p255 = pneg %p62
        %p256 = pneg %p86
        %p257 = pneg %p83
        %p258 = pneg %p107
        %p259 = pneg %p104
        %p260 = pneg %p128
        %p261 = pneg %p125
        %p262 = pneg %p154
        %p263 = pneg %p151
        %s264 = sand.u32 %s141, 1
        %s265 = scalar_lea.sflag [#allocation4], %s264
        %s266 = sand.u32 %s141, 1
        %s267 = scalar_lea.vmem [#allocation8], %s266
        %v269 = vld [vmem:[%s234] sm:$0xf]
        %v270 = vld [vmem:[#allocation5] sm:$0xf]
        %v271 = vld [vmem:[#allocation5 + $0x4] sm:$0xf]
        %v272 = vld [vmem:[#allocation5 + $0x8] sm:$0xf]
        %v273 = vld [vmem:[#allocation5 + $0xc] sm:$0xf]
        %v278 = vunpack.c.l.b16 %v270
        %v279 = vunpack.c.l.b16 %v271
        %v280 = vunpack.c.l.b16 %v272
        %v281 = vunpack.c.l.b16 %v273
        %v282 = vpack.c.b16 %v279, %v278
        %v283 = vpack.c.b16 %v281, %v280
        %vm286 = vcmask 261120
        %v288 = vsel %vm286, %v269, 0
        %290 = vmatprep.subr.bf16.mxu0 0
        %291 = vmatpush1.bf16.msra.mxu0 %v282
        %292 = vmatprep.subr.bf16.mxu0 0
        %293 = vmatpush1.bf16.msra.mxu0 %v283
        %294 = vmatprep.subr.bf16.mxu0 0
        %295 = vmatpush1.bf16.msra.mxu0 0
        %296 = vmatprep.subr.bf16.mxu0 0
        %297 = vmatpush1.bf16.msra.mxu0 0
        %298 = vmatprep.subr.bf16.mxu0 0
        %299 = vmatpush1.bf16.msra.mxu0 0
        %300 = vmatprep.subr.bf16.mxu0 0
        %301 = vmatpush1.bf16.msra.mxu0 0
        %302 = vmatprep.subr.bf16.mxu0 0
        %303 = vmatpush1.bf16.msra.mxu0 0
        %304 = vmatprep.subr.bf16.mxu0 0
        %305 = vmatpush1.bf16.msra.mxu0 0
        %306 = vmatprep.subr.bf16.mxu0 0
        %307 = vmatpush1.bf16.msra.mxu0 0
        %308 = vmatprep.subr.bf16.mxu0 0
        %309 = vmatpush1.bf16.msra.mxu0 0
        %310 = vmatprep.subr.bf16.mxu0 0
        %311 = vmatpush1.bf16.msra.mxu0 0
        %312 = vmatprep.subr.bf16.mxu0 0
        %313 = vmatpush1.bf16.msra.mxu0 0
        %314 = vmatprep.subr.bf16.mxu0 0
        %315 = vmatpush1.bf16.msra.mxu0 0
        %316 = vmatprep.subr.bf16.mxu0 0
        %317 = vmatpush1.bf16.msra.mxu0 0
        %318 = vmatprep.subr.bf16.mxu0 0
        %319 = vmatpush1.bf16.msra.mxu0 0
        %320 = vmatprep.subr.bf16.mxu0 0
        %321 = vmatpush1.bf16.msra.mxu0 0
        %322 = vmatprep.mubr.bf16.mxu0 0
        %323 = vmatmul.mubr.bf16.gmra.mrb[0].mxu0 %v288
        %v324 = vpop.f32.mrb[0].mxu0
        %v325 = vadd.f32 0.0, %v324
        %v326 = vpop.f32.mrb[0].mxu0
        %v327 = vpop.f32.mrb[0].mxu0
        %v328 = vpop.f32.mrb[0].mxu0
        %329 = vdwg.mxu0
        %v330 = vld [vmem:[#allocation7] sm:$0xf]
        %v331 = vld [vmem:[#allocation7 + $0x4] sm:$0xf]
        %v332 = vld [vmem:[#allocation7 + $0x8] sm:$0xf]
        %v333 = vld [vmem:[#allocation7 + $0xc] sm:$0xf]
        %v338 = vunpack.c.l.b16 %v330
        %v339 = vunpack.c.l.b16 %v331
        %v340 = vunpack.c.l.b16 %v332
        %v341 = vunpack.c.l.b16 %v333
        %v342 = vpack.c.b16 %v339, %v338
        %v343 = vpack.c.b16 %v341, %v340
        %346 = vmatprep.subr.bf16.mxu0 0
        %347 = vmatpush1.bf16.msra.mxu0 %v342
        %348 = vmatprep.subr.bf16.mxu0 0
        %349 = vmatpush1.bf16.msra.mxu0 %v343
        %350 = vmatprep.subr.bf16.mxu0 0
        %351 = vmatpush1.bf16.msra.mxu0 0
        %352 = vmatprep.subr.bf16.mxu0 0
        %353 = vmatpush1.bf16.msra.mxu0 0
        %354 = vmatprep.subr.bf16.mxu0 0
        %355 = vmatpush1.bf16.msra.mxu0 0
        %356 = vmatprep.subr.bf16.mxu0 0
        %357 = vmatpush1.bf16.msra.mxu0 0
        %358 = vmatprep.subr.bf16.mxu0 0
        %359 = vmatpush1.bf16.msra.mxu0 0
        %360 = vmatprep.subr.bf16.mxu0 0
        %361 = vmatpush1.bf16.msra.mxu0 0
        %362 = vmatprep.subr.bf16.mxu0 0
        %363 = vmatpush1.bf16.msra.mxu0 0
        %364 = vmatprep.subr.bf16.mxu0 0
        %365 = vmatpush1.bf16.msra.mxu0 0
        %366 = vmatprep.subr.bf16.mxu0 0
        %367 = vmatpush1.bf16.msra.mxu0 0
        %368 = vmatprep.subr.bf16.mxu0 0
        %369 = vmatpush1.bf16.msra.mxu0 0
        %370 = vmatprep.subr.bf16.mxu0 0
        %371 = vmatpush1.bf16.msra.mxu0 0
        %372 = vmatprep.subr.bf16.mxu0 0
        %373 = vmatpush1.bf16.msra.mxu0 0
        %374 = vmatprep.subr.bf16.mxu0 0
        %375 = vmatpush1.bf16.msra.mxu0 0
        %376 = vmatprep.subr.bf16.mxu0 0
        %377 = vmatpush1.bf16.msra.mxu0 0
        %378 = vmatprep.mubr.bf16.mxu0 0
        %379 = vmatmul.mubr.bf16.gmra.mrb[0].mxu0 %v288
        %v380 = vpop.f32.mrb[0].mxu0
        %v381 = vadd.f32 0.0, %v380
        %v382 = vpop.f32.mrb[0].mxu0
        %v383 = vpop.f32.mrb[0].mxu0
        %v384 = vpop.f32.mrb[0].mxu0
        %385 = vdwg.mxu0
        %v386 = vld [vmem:[%s3] sm:$0xf]
        %v387 = vunpack.c.l.bf16 %v386
        %v388 = vld [vmem:[%s4] sm:$0xf]
        %v389 = vunpack.c.l.bf16 %v388
        %v390 = vmul.f32 %v325, %v387
        %v391 = vmul.f32 %v381, %v389
        %v392 = vadd.f32 %v390, %v391
        %v393 = vpack.c.bf16 %v392, %v392
        %395 = vrot.lane.b32.xlu0 %v393, 64
        %v396 = vpop.permute.xlu0 %395
        %vm397 = vcmask 130048
        %v399 = vsel %vm397, %v393, 0
        %v402 = vsel %vm397, %v396, 0
        %404 = vmatprep.subr.bf16.mxu0 0
        %405 = vmatpush1.bf16.xpose.msra.mxu0 %v402
        %406 = vmatprep.subr.bf16.mxu0 0
        %407 = vmatpush1.bf16.xpose.msra.mxu0 0
        %408 = vmatprep.subr.bf16.mxu0 0
        %409 = vmatpush1.bf16.xpose.msra.mxu0 0
        %410 = vmatprep.subr.bf16.mxu0 0
        %411 = vmatpush1.bf16.xpose.msra.mxu0 0
        %412 = vmatprep.subr.bf16.mxu0 0
        %413 = vmatpush1.bf16.xpose.msra.mxu0 0
        %414 = vmatprep.subr.bf16.mxu0 0
        %415 = vmatpush1.bf16.xpose.msra.mxu0 0
        %416 = vmatprep.subr.bf16.mxu0 0
        %417 = vmatpush1.bf16.xpose.msra.mxu0 0
        %418 = vmatprep.subr.bf16.mxu0 0
        %419 = vmatpush1.bf16.xpose.msra.mxu0 0
        %420 = vmatprep.subr.bf16.mxu0 0
        %421 = vmatpush1.bf16.xpose.msra.mxu0 0
        %422 = vmatprep.subr.bf16.mxu0 0
        %423 = vmatpush1.bf16.xpose.msra.mxu0 0
        %424 = vmatprep.subr.bf16.mxu0 0
        %425 = vmatpush1.bf16.xpose.msra.mxu0 0
        %426 = vmatprep.subr.bf16.mxu0 0
        %427 = vmatpush1.bf16.xpose.msra.mxu0 0
        %428 = vmatprep.subr.bf16.mxu0 0
        %429 = vmatpush1.bf16.xpose.msra.mxu0 0
        %430 = vmatprep.subr.bf16.mxu0 0
        %431 = vmatpush1.bf16.xpose.msra.mxu0 0
        %432 = vmatprep.subr.bf16.mxu0 0
        %433 = vmatpush1.bf16.xpose.msra.mxu0 0
        %434 = vmatprep.subr.bf16.mxu0 0
        %435 = vmatpush1.bf16.xpose.msra.mxu0 0
        %436 = vmatprep.mubr.bf16.mxu0 0
        %437 = vmatmul.mubr.bf16.gmra.mrb[0].mxu0 %v399
        %v438 = vpop.f32.mrb[0].mxu0
        %v439 = vadd.f32 0.0, %v438
        %v440 = vpop.f32.mrb[0].mxu0
        %v441 = vpop.f32.mrb[0].mxu0
        %v442 = vpop.f32.mrb[0].mxu0
        %443 = vdwg.mxu0
        %vm444 = vcmask 64512
        %v445 = vsel %vm444, %v439, -inf
        %446 = vmax.xlane.f32.xlu0 %v445
        %v447 = vpop.xlane.xlu0 %446
        %v448 = vsub.f32 %v439, %v447
        %v449 = vmul.f32 %v448, 1.442695
        %v450 = vpow.pop %v449
        %v451 = vsel %vm444, %v450, 0.0
        %452 = vadd.xlane.f32.xlu0 %v451
        %v453 = vpop.xlane.xlu0 %452
        %v454 = vrcp.pop %v453
        %v455 = vmul.f32 %v450, %v454
        %v456 = vsel %vm444, %v455, 0.0
        %v457 = vrot.slane %v456, 4
        %v458 = vadd.f32 %v456, %v457
        %v459 = vrot.slane %v458, 2
        %v460 = vadd.f32 %v458, %v459
        %v461 = vrot.slane %v460, 1
        %v462 = vadd.f32 %v460, %v461
        %v463 = vadd.f32 %v462, 0.0
        %464 = vrot.lane.b32.xlu0 %v393, 112
        %v465 = vpop.permute.xlu0 %464
        %v467 = vsel %vm397, %v465, 0
        %469 = vmatprep.subr.bf16.mxu0 0
        %470 = vmatpush1.bf16.xpose.msra.mxu0 %v402
        %471 = vmatprep.subr.bf16.mxu0 0
        %472 = vmatpush1.bf16.xpose.msra.mxu0 0
        %473 = vmatprep.subr.bf16.mxu0 0
        %474 = vmatpush1.bf16.xpose.msra.mxu0 0
        %475 = vmatprep.subr.bf16.mxu0 0
        %476 = vmatpush1.bf16.xpose.msra.mxu0 0
        %477 = vmatprep.subr.bf16.mxu0 0
        %478 = vmatpush1.bf16.xpose.msra.mxu0 0
        %479 = vmatprep.subr.bf16.mxu0 0
        %480 = vmatpush1.bf16.xpose.msra.mxu0 0
        %481 = vmatprep.subr.bf16.mxu0 0
        %482 = vmatpush1.bf16.xpose.msra.mxu0 0
        %483 = vmatprep.subr.bf16.mxu0 0
        %484 = vmatpush1.bf16.xpose.msra.mxu0 0
        %485 = vmatprep.subr.bf16.mxu0 0
        %486 = vmatpush1.bf16.xpose.msra.mxu0 0
        %487 = vmatprep.subr.bf16.mxu0 0
        %488 = vmatpush1.bf16.xpose.msra.mxu0 0
        %489 = vmatprep.subr.bf16.mxu0 0
        %490 = vmatpush1.bf16.xpose.msra.mxu0 0
        %491 = vmatprep.subr.bf16.mxu0 0
        %492 = vmatpush1.bf16.xpose.msra.mxu0 0
        %493 = vmatprep.subr.bf16.mxu0 0
        %494 = vmatpush1.bf16.xpose.msra.mxu0 0
        %495 = vmatprep.subr.bf16.mxu0 0
        %496 = vmatpush1.bf16.xpose.msra.mxu0 0
        %497 = vmatprep.subr.bf16.mxu0 0
        %498 = vmatpush1.bf16.xpose.msra.mxu0 0
        %499 = vmatprep.subr.bf16.mxu0 0
        %500 = vmatpush1.bf16.xpose.msra.mxu0 0
        %501 = vmatprep.mubr.bf16.mxu0 0
        %502 = vmatmul.mubr.bf16.gmra.mrb[0].mxu0 %v467
        %v503 = vpop.f32.mrb[0].mxu0
        %v504 = vadd.f32 0.0, %v503
        %v505 = vpop.f32.mrb[0].mxu0
        %v506 = vpop.f32.mrb[0].mxu0
        %v507 = vpop.f32.mrb[0].mxu0
        %508 = vdwg.mxu0
        %v509 = vsel %vm444, %v504, -inf
        %510 = vmax.xlane.f32.xlu0 %v509
        %v511 = vpop.xlane.xlu0 %510
        %v512 = vsub.f32 %v504, %v511
        %v513 = vmul.f32 %v512, 1.442695
        %v514 = vpow.pop %v513
        %v515 = vsel %vm444, %v514, 0.0
        %516 = vadd.xlane.f32.xlu0 %v515
        %v517 = vpop.xlane.xlu0 %516
        %v518 = vrcp.pop %v517
        %v519 = vmul.f32 %v514, %v518
        %v520 = vsel %vm444, %v519, 0.0
        %v521 = vrot.slane %v520, 4
        %v522 = vadd.f32 %v520, %v521
        %v523 = vrot.slane %v522, 2
        %v524 = vadd.f32 %v522, %v523
        %v525 = vrot.slane %v524, 1
        %v526 = vadd.f32 %v524, %v525
        %v527 = vadd.f32 %v463, %v526
        %528 = vrot.lane.b32.xlu0 %v393, 96
        %v529 = vpop.permute.xlu0 %528
        %530 = vrot.lane.b32.xlu0 %v393, 48
        %v531 = vpop.permute.xlu0 %530
        %v533 = vsel %vm397, %v529, 0
        %v536 = vsel %vm397, %v531, 0
        %538 = vmatprep.subr.bf16.mxu0 0
        %539 = vmatpush1.bf16.xpose.msra.mxu0 %v536
        %540 = vmatprep.subr.bf16.mxu0 0
        %541 = vmatpush1.bf16.xpose.msra.mxu0 0
        %542 = vmatprep.subr.bf16.mxu0 0
        %543 = vmatpush1.bf16.xpose.msra.mxu0 0
        %544 = vmatprep.subr.bf16.mxu0 0
        %545 = vmatpush1.bf16.xpose.msra.mxu0 0
        %546 = vmatprep.subr.bf16.mxu0 0
        %547 = vmatpush1.bf16.xpose.msra.mxu0 0
        %548 = vmatprep.subr.bf16.mxu0 0
        %549 = vmatpush1.bf16.xpose.msra.mxu0 0
        %550 = vmatprep.subr.bf16.mxu0 0
        %551 = vmatpush1.bf16.xpose.msra.mxu0 0
        %552 = vmatprep.subr.bf16.mxu0 0
        %553 = vmatpush1.bf16.xpose.msra.mxu0 0
        %554 = vmatprep.subr.bf16.mxu0 0
        %555 = vmatpush1.bf16.xpose.msra.mxu0 0
        %556 = vmatprep.subr.bf16.mxu0 0
        %557 = vmatpush1.bf16.xpose.msra.mxu0 0
        %558 = vmatprep.subr.bf16.mxu0 0
        %559 = vmatpush1.bf16.xpose.msra.mxu0 0
        %560 = vmatprep.subr.bf16.mxu0 0
        %561 = vmatpush1.bf16.xpose.msra.mxu0 0
        %562 = vmatprep.subr.bf16.mxu0 0
        %563 = vmatpush1.bf16.xpose.msra.mxu0 0
        %564 = vmatprep.subr.bf16.mxu0 0
        %565 = vmatpush1.bf16.xpose.msra.mxu0 0
        %566 = vmatprep.subr.bf16.mxu0 0
        %567 = vmatpush1.bf16.xpose.msra.mxu0 0
        %568 = vmatprep.subr.bf16.mxu0 0
        %569 = vmatpush1.bf16.xpose.msra.mxu0 0
        %570 = vmatprep.mubr.bf16.mxu0 0
        %571 = vmatmul.mubr.bf16.gmra.mrb[0].mxu0 %v533
        %v572 = vpop.f32.mrb[0].mxu0
        %v573 = vadd.f32 0.0, %v572
        %v574 = vpop.f32.mrb[0].mxu0
        %v575 = vpop.f32.mrb[0].mxu0
        %v576 = vpop.f32.mrb[0].mxu0
        %577 = vdwg.mxu0
        %v578 = vsel %vm444, %v573, -inf
        %579 = vmax.xlane.f32.xlu0 %v578
        %v580 = vpop.xlane.xlu0 %579
        %v581 = vsub.f32 %v573, %v580
        %v582 = vmul.f32 %v581, 1.442695
        %v583 = vpow.pop %v582
        %v584 = vsel %vm444, %v583, 0.0
        %585 = vadd.xlane.f32.xlu0 %v584
        %v586 = vpop.xlane.xlu0 %585
        %v587 = vrcp.pop %v586
        %v588 = vmul.f32 %v583, %v587
        %v589 = vsel %vm444, %v588, 0.0
        %v590 = vrot.slane %v589, 4
        %v591 = vadd.f32 %v589, %v590
        %v592 = vrot.slane %v591, 2
        %v593 = vadd.f32 %v591, %v592
        %v594 = vrot.slane %v593, 1
        %v595 = vadd.f32 %v593, %v594
        %v596 = vadd.f32 %v527, %v595
        %597 = vrot.lane.b32.xlu0 %v393, 80
        %v598 = vpop.permute.xlu0 %597
        %v600 = vsel %vm397, %v598, 0
        %602 = vmatprep.subr.bf16.mxu0 0
        %603 = vmatpush1.bf16.xpose.msra.mxu0 %v536
        %604 = vmatprep.subr.bf16.mxu0 0
        %605 = vmatpush1.bf16.xpose.msra.mxu0 0
        %606 = vmatprep.subr.bf16.mxu0 0
        %607 = vmatpush1.bf16.xpose.msra.mxu0 0
        %608 = vmatprep.subr.bf16.mxu0 0
        %609 = vmatpush1.bf16.xpose.msra.mxu0 0
        %610 = vmatprep.subr.bf16.mxu0 0
        %611 = vmatpush1.bf16.xpose.msra.mxu0 0
        %612 = vmatprep.subr.bf16.mxu0 0
        %613 = vmatpush1.bf16.xpose.msra.mxu0 0
        %614 = vmatprep.subr.bf16.mxu0 0
        %615 = vmatpush1.bf16.xpose.msra.mxu0 0
        %616 = vmatprep.subr.bf16.mxu0 0
        %617 = vmatpush1.bf16.xpose.msra.mxu0 0
        %618 = vmatprep.subr.bf16.mxu0 0
        %619 = vmatpush1.bf16.xpose.msra.mxu0 0
        %620 = vmatprep.subr.bf16.mxu0 0
        %621 = vmatpush1.bf16.xpose.msra.mxu0 0
        %622 = vmatprep.subr.bf16.mxu0 0
        %623 = vmatpush1.bf16.xpose.msra.mxu0 0
        %624 = vmatprep.subr.bf16.mxu0 0
        %625 = vmatpush1.bf16.xpose.msra.mxu0 0
        %626 = vmatprep.subr.bf16.mxu0 0
        %627 = vmatpush1.bf16.xpose.msra.mxu0 0
        %628 = vmatprep.subr.bf16.mxu0 0
        %629 = vmatpush1.bf16.xpose.msra.mxu0 0
        %630 = vmatprep.subr.bf16.mxu0 0
        %631 = vmatpush1.bf16.xpose.msra.mxu0 0
        %632 = vmatprep.subr.bf16.mxu0 0
        %633 = vmatpush1.bf16.xpose.msra.mxu0 0
        %634 = vmatprep.mubr.bf16.mxu0 0
        %635 = vmatmul.mubr.bf16.gmra.mrb[0].mxu0 %v600
        %v636 = vpop.f32.mrb[0].mxu0
        %v637 = vadd.f32 0.0, %v636
        %v638 = vpop.f32.mrb[0].mxu0
        %v639 = vpop.f32.mrb[0].mxu0
        %v640 = vpop.f32.mrb[0].mxu0
        %641 = vdwg.mxu0
        %v642 = vsel %vm444, %v637, -inf
        %643 = vmax.xlane.f32.xlu0 %v642
        %v644 = vpop.xlane.xlu0 %643
        %v645 = vsub.f32 %v637, %v644
        %v646 = vmul.f32 %v645, 1.442695
        %v647 = vpow.pop %v646
        %v648 = vsel %vm444, %v647, 0.0
        %649 = vadd.xlane.f32.xlu0 %v648
        %v650 = vpop.xlane.xlu0 %649
        %v651 = vrcp.pop %v650
        %v652 = vmul.f32 %v647, %v651
        %v653 = vsel %vm444, %v652, 0.0
        %v654 = vrot.slane %v653, 4
        %v655 = vadd.f32 %v653, %v654
        %v656 = vrot.slane %v655, 2
        %v657 = vadd.f32 %v655, %v656
        %v658 = vrot.slane %v657, 1
        %v659 = vadd.f32 %v657, %v658
        %v660 = vadd.f32 %v596, %v659
        %v661 = vmul.f32 %v660, 0.03125
        %vm662 = vcmask 57344
        %663 = vst.msk [vmem:[%s267] sm:$0x1] %vm662, %v661
        %s664 = sand.u32 %s141, 1
        %s665 = scalar_lea.sflag [#allocation4], %s664
        %s666 = sand.u32 %s141, 1
        %s667 = scalar_lea.vmem [#allocation8], %s666
        // Predicated region
        $region53: #{tpu_custom_call.1} parent=39 // pred_check
          %p668 = pneg %p151
        $region54: #{tpu_custom_call.1} parent=39 // pred_check_branch
          %670 = sbr.rel (%p668) target = $region56
        $region55: #{tpu_custom_call.1} parent=39 // pred_region
          %s672 = ssub.s32 16, 16
          %673 = vsyncadd %s665, %s672
          %s674 = smul.addr %s23, 16
          %s675 = scalar_lea.hbm %s5, %s674
          %s677 = sshll.u32 %s667, 4
          %s678 = int_to_ptr.vmem [resolvable:$true] %s677
          %680 = dma.vmem_to_hbm [thread:$0]  %s678, 16, %s675, %s665
        $region56: #{tpu_custom_call.1} parent=39 // pred_fallthru
          _
      $region40: #{tpu_custom_call.1} parent=5 // pred_fallthru
        _
      %p681 = scmp.le.s32.totalorder 2, %s18
      // Predicated region
      $region57: #{tpu_custom_call.1} parent=5 // pred_check
        %p682 = pneg %p681
      $region58: #{tpu_custom_call.1} parent=5 // pred_check_branch
        %684 = sbr.rel (%p682) target = $region60
      $region59: #{tpu_custom_call.1} parent=5 // pred_region
        %s685 = ssub.s32 %s18, 2
        // Predicated region
        $region61: #{tpu_custom_call.1} parent=59 // pred_check
          %p686 = pneg %p157
        $region62: #{tpu_custom_call.1} parent=59 // pred_check_branch
          %688 = sbr.rel (%p686) target = $region64
        $region63: #{tpu_custom_call.1} parent=59 // pred_region
          %s689 = sand.u32 %s142, 1
          %s690 = scalar_lea.sflag [#allocation4], %s689
          %s691 = sand.u32 %s142, 1
          %s692 = scalar_lea.vmem [#allocation8], %s691
          %693 = dma.done %s690, 16
        $region64: #{tpu_custom_call.1} parent=59 // pred_fallthru
          _
      $region60: #{tpu_custom_call.1} parent=5 // pred_fallthru
        _
    $region6: #{tpu_custom_call.1} parent=1 // loop_footer
      %s22 = sadd.s32 1, %s18
    $region7: #{tpu_custom_call.1} parent=1 // loop_footer_branch
      %17 = sbr.rel target = $region3
    $region8: #{tpu_custom_call.1} parent=1 // loop_exit
      _
    %694 = vsyncpa [#allocation3], 1
    %s695 = scalar_lea.sflag [#allocation3], 1
    %696 = vsyncpa %s695, 1
    %697 = vsyncpa [#allocation6], 1
    %698 = vsyncpa [#allocation4], 1
    %s699 = scalar_lea.sflag [#allocation4], 1
    %700 = vsyncpa %s699, 1

</llo_original>
